<compile_context>
chip_gen: v7x
topology: tpu7x:2x2x1
jax: 0.10.0
libtpu: 0.0.40
codegen_flags: <defaults>
</compile_context>

<pallas_src>
import functools

import jax
import jax.numpy as jnp
from jax.experimental import pallas as pl
from jax.experimental.pallas import tpu as pltpu


def _bbvi_kernel(docs_ref, elam_ref, topics_ref, doct_ref, out_ref,
                 acc_lt_ref, acc_lwp_ref, *, s_blk):
    """One (vocab-tile, sample-block) grid step of the sample-dependent ELBO terms."""
    sb = pl.program_id(1)        # sample-block index (reduction axis, innermost)

    @pl.when(sb == 0)
    def _init():
        acc_lt_ref[...] = jnp.zeros_like(acc_lt_ref)    # sum_s log(topics_s)   (K, TV)
        acc_lwp_ref[...] = jnp.zeros_like(acc_lwp_ref)  # sum_s log(wp_s+eps)   (D, TV)

    # Per-sample work is ONLY the MXU matmul + EUP logs + elementwise adds; no cross-lane
    # reductions and no (K,TV)/(D,TV) multiplies inside the sample loop.  fori_loop with
    # unroll=True keeps the (D, TV) wp temporaries' live ranges bounded.
    def body(i, carry):
        lt, lwp = carry
        topics = topics_ref[i]          # (K, TV)  this sample's topic-word tile
        doct = doct_ref[i]              # (D, K)   this sample's doc-topic proportions
        wp = jnp.dot(doct, topics, preferred_element_type=jnp.float32)   # (D, TV) on MXU
        return lt + jnp.log(topics), lwp + jnp.log(wp + 1e-10)

    lt, lwp = jax.lax.fori_loop(
        0, s_blk, body, (acc_lt_ref[...], acc_lwp_ref[...]), unroll=True)
    acc_lt_ref[...] = lt
    acc_lwp_ref[...] = lwp

    @pl.when(sb == pl.num_programs(1) - 1)
    def _flush():
        # Multiply by the sample-invariant factors and reduce ONCE per vocab tile
        # (n_v_tiles full reductions total -> negligible XLU/VPU cost).
        partial = (jnp.sum(elam_ref[...] * acc_lt_ref[...])
                   + jnp.sum(docs_ref[...] * acc_lwp_ref[...]))
        # lane-dense, (8,128)-aligned partial-sum block for this vocab tile
        out_ref[...] = jnp.full((8, 128), partial, dtype=jnp.float32)


def _vmem_bytes_estimate(tile_v, n_docs, k, s_blk):
    """Rough VMEM footprint for one grid step (f32, default double-buffered inputs)."""
    f32 = 4
    docs_b = n_docs * tile_v * f32 * 2          # vocab-resident doc counts tile
    elam_b = k * tile_v * f32 * 2               # (eta0 - lambda) tile
    topics_b = s_blk * k * tile_v * f32 * 2     # streamed topic samples block
    doct_b = s_blk * n_docs * k * f32 * 2       # streamed doc-topic samples block
    acc_lt = k * tile_v * f32                   # scratch: sum_s log topics
    acc_lwp = n_docs * tile_v * f32             # scratch: sum_s log wp
    out_b = 8 * 128 * f32 * 2
    wp_live = n_docs * tile_v * f32             # live matmul temp inside the fori body
    return docs_b + elam_b + topics_b + doct_b + acc_lt + acc_lwp + out_b + wp_live


def _plan_tiles(vocab_size, n_docs, k, n_samples, tile_budget_bytes):
    """Choose (tile_v, s_blk) from the VMEM budget and actual problem sizes."""
    if vocab_size % 128 == 0:
        cands = [t for t in range(vocab_size, 127, -128) if vocab_size % t == 0]
    else:
        cands = [vocab_size]
    # Prefer >=2 vocab tiles so the "parallel" axis actually splits across both
    # TensorCores on v7x; among those, take the largest tile that fits the budget.
    multi = [t for t in cands if vocab_size // t >= 2]
    single = [t for t in cands if t not in multi]
    ordered = multi + single if multi else cands
    s_blk_cands = [s for s in (8, 4, 2, 1) if n_samples % s == 0]
    for tile_v in ordered:
        for s_blk in s_blk_cands:
            if _vmem_bytes_estimate(tile_v, n_docs, k, s_blk) <= tile_budget_bytes:
                return tile_v, s_blk
    return cands[-1], 1


def lda_bbvi_forward(docs, topic_log_var, key, *, n_topics, alpha0=1.0,
                     eta0=1.0, n_samples=10):
    """Negative ELBO estimate, matching LDABBVI.forward semantics."""
    docs = docs.astype(jnp.float32)   # exact for word counts < 2**24
    n_docs, vocab_size = docs.shape
    k = n_topics

    # setup_doc_params: doc_log_var = zeros + log(1/K)
    doc_log_var = jnp.full((n_docs, k), jnp.log(1.0 / k), dtype=jnp.float32)

    lam = jnp.exp(topic_log_var).astype(jnp.float32)   # (K, V)
    gam = jnp.exp(doc_log_var).astype(jnp.float32)     # (D, K)

    # TODO(synk): Dirichlet rsample (reparameterized gamma sampling) and the lgamma
    # log-normalizer constants have no clean Pallas equivalent; kept in JAX glue.
    key_t, key_d = jax.random.split(key)
    topics = jax.random.dirichlet(key_t, lam, shape=(n_samples, k)
                                  ).astype(jnp.float32)           # (S, K, V)
    doc_topics = jax.random.dirichlet(key_d, gam, shape=(n_samples, n_docs)
                                      ).astype(jnp.float32)       # (S, D, K)

    # Nudge draws onto the open simplex so log() stays finite under f32 underflow.
    eps = jnp.float32(1e-6)
    topics = (topics + eps) / jnp.sum(topics + eps, axis=-1, keepdims=True)
    doc_topics = (doc_topics + eps) / jnp.sum(doc_topics + eps, axis=-1, keepdims=True)

    # Sample-invariant difference factors, precomputed once.
    elam = (eta0 - lam).astype(jnp.float32)             # (K, V)
    agam = (alpha0 - gam).astype(jnp.float32)           # (D, K)

    # Doc-topic exponent term hoisted out of the kernel: K-lane narrow (would waste
    # 15/16 of the vector lanes) and XLA fuses it with the renormalization above.
    doc_term = jnp.sum(agam[None] * jnp.log(doc_topics))

    # Generation-aware VMEM budget (v7x has 64 MiB/TC vs 128 MiB on v5e/v6e).
    vmem_cap = 64 * 1024 * 1024
    try:
        vmem_cap = int(getattr(pltpu.get_tpu_info(), "vmem_capacity_bytes", vmem_cap))
    except Exception:
        pass
    vmem_limit = int(min(0.6 * vmem_cap, 96 * 1024 * 1024))
    tile_v, s_blk = _plan_tiles(vocab_size, n_docs, k, n_samples,
                                int(0.7 * vmem_limit))
    n_v_tiles = vocab_size // tile_v
    n_s_blocks = n_samples // s_blk

    kernel = functools.partial(_bbvi_kernel, s_blk=s_blk)

    out = pl.pallas_call(
        kernel,
        out_shape=jax.ShapeDtypeStruct((8 * n_v_tiles, 128), jnp.float32),
        grid_spec=pltpu.PrefetchScalarGridSpec(
            num_scalar_prefetch=0,
            grid=(n_v_tiles, n_s_blocks),   # sample (reduction) axis innermost
            in_specs=[
                pl.BlockSpec((n_docs, tile_v), lambda v, s: (0, v)),       # docs tile (v-resident)
                pl.BlockSpec((k, tile_v), lambda v, s: (0, v)),            # eta0 - lambda tile
                pl.BlockSpec((s_blk, k, tile_v), lambda v, s: (s, 0, v)),  # topics[s-block, :, v-tile]
                pl.BlockSpec((s_blk, n_docs, k), lambda v, s: (s, 0, 0)),  # doc_topics[s-block]
            ],
            out_specs=pl.BlockSpec((8, 128), lambda v, s: (v, 0)),         # per-V-tile partial sum
            scratch_shapes=[pltpu.VMEM((k, tile_v), jnp.float32),          # sum_s log topics
                            pltpu.VMEM((n_docs, tile_v), jnp.float32)],    # sum_s log wp
        ),
        compiler_params=pltpu.CompilerParams(
            dimension_semantics=("parallel", "arbitrary"),
            vmem_limit_bytes=vmem_limit,
        ),
    )(docs, elam, topics, doc_topics)

    # every element of a tile's (8,128) output block holds the same per-tile partial sum
    sample_sum = jnp.sum(out.reshape(n_v_tiles, 8, 128)[:, 0, 0])

    # Sample-independent lgamma log-normalizer constants (plain JAX glue).
    lgamma = jax.lax.lgamma
    log_b_eta = vocab_size * lgamma(jnp.float32(eta0)) - lgamma(jnp.float32(vocab_size * eta0))
    log_b_alpha = k * lgamma(jnp.float32(alpha0)) - lgamma(jnp.float32(k * alpha0))
    log_b_lam = jnp.sum(lgamma(lam), axis=1) - lgamma(jnp.sum(lam, axis=1))   # (K,)
    log_b_gam = jnp.sum(lgamma(gam), axis=1) - lgamma(jnp.sum(gam, axis=1))   # (D,)
    const = (-k * log_b_eta - n_docs * log_b_alpha
             + jnp.sum(log_b_lam) + jnp.sum(log_b_gam))

    elbo = (sample_sum + doc_term) / n_samples + const
    return -elbo, (topics, doc_topics)


def _reference_neg_elbo(docs, lam, gam, topics, doc_topics, eta0, alpha0):
    """Pure-JAX reference following the PyTorch code structure exactly."""
    lgamma = jax.lax.lgamma
    s, k, v = topics.shape

    def dir_logprob(x, conc):
        return (jnp.sum((conc - 1.0) * jnp.log(x), axis=-1)
                - (jnp.sum(lgamma(conc), axis=-1) - lgamma(jnp.sum(conc, axis=-1))))

    elbo = 0.0
    for si in range(s):
        t = topics[si]
        dt = doc_topics[si]
        log_p_topics = jnp.sum(dir_logprob(t, jnp.full((v,), eta0, jnp.float32)))
        log_p_doct = jnp.sum(dir_logprob(dt, jnp.full((k,), alpha0, jnp.float32)))
        wp = dt @ t
        log_lik = jnp.sum(jnp.where(docs > 0, docs * jnp.log(wp + 1e-10), 0.0))
        log_q = jnp.sum(dir_logprob(t, lam)) + jnp.sum(dir_logprob(dt, gam))
        elbo = elbo + (log_p_topics + log_p_doct + log_lik - log_q)
    return -(elbo / s)


if __name__ == "__main__":
    VOCAB = 128
    N_TOPICS = 8
    N_DOCS = 8
    N_SAMPLES = 4

    root = jax.random.PRNGKey(0)
    k_param, k_docs, k_samp = jax.random.split(root, 3)

    # Deterministic parameter init mirroring __init__:
    #   topic_log_var = randn(K, V) * 0.01 + log(1/V)
    topic_log_var = (jax.random.normal(k_param, (N_TOPICS, VOCAB), jnp.float32) * 0.01
                     + jnp.log(1.0 / VOCAB))

    # Synthetic docs: non-negative integer word counts (float32), shape (D, V)
    docs = jax.random.poisson(k_docs, 0.5, (N_DOCS, VOCAB)).astype(jnp.float32)

    neg_elbo, (topics, doc_topics) = lda_bbvi_forward(
        docs, topic_log_var, k_samp,
        n_topics=N_TOPICS, alpha0=1.0, eta0=1.0, n_samples=N_SAMPLES)
    neg_elbo = jax.block_until_ready(neg_elbo)

    # Verify against a pure-JAX reference using the identical Dirichlet samples.
    lam = jnp.exp(topic_log_var)
    gam = jnp.full((N_DOCS, N_TOPICS), 1.0 / N_TOPICS, jnp.float32)
    ref = jax.block_until_ready(
        _reference_neg_elbo(docs, lam, gam, topics, doc_topics, 1.0, 1.0))

    assert jnp.isfinite(neg_elbo), "non-finite result"
    assert jnp.allclose(neg_elbo, ref, rtol=5e-4, atol=5e-2), (neg_elbo, ref)
    print("KERNEL_OK")
</pallas_src>

<mosaic_0001>
module attributes {stable_mosaic.version = 11 : i64} {
  func.func @_bbvi_kernel(%arg0: i32, %arg1: i32, %arg2: memref<8x128xf32, #tpu.memory_space<vmem>>, %arg3: memref<8x128xf32, #tpu.memory_space<vmem>>, %arg4: memref<4x8x128xf32, #tpu.memory_space<vmem>>, %arg5: memref<4x8x8xf32, #tpu.memory_space<vmem>>, %arg6: memref<8x128xf32, #tpu.memory_space<vmem>>, %arg7: memref<8x128xf32, #tpu.memory_space<vmem>>, %arg8: memref<8x128xf32, #tpu.memory_space<vmem>>) attributes {dimension_semantics = [#tpu.dimension_semantics<parallel>, #tpu.dimension_semantics<arbitrary>], iteration_bounds = array<i64: 1, 1>, scalar_prefetch = 0 : i64, scratch_operands = 2 : i64, tpu.core_type = #tpu.core_type<tc>, window_params = [{transform_indices = @transform_0, window_bounds = array<i64: 8, 128>}, {transform_indices = @transform_1, window_bounds = array<i64: 8, 128>}, {transform_indices = @transform_2, window_bounds = array<i64: 4, 8, 128>}, {transform_indices = @transform_3, window_bounds = array<i64: 4, 8, 8>}, {transform_indices = @transform_4, window_bounds = array<i64: 8, 128>}]} {
    %c0_i32 = arith.constant 0 : i32
    %0 = arith.cmpi eq, %arg1, %c0_i32 : i32
    %1 = arith.extui %0 : i1 to i32
    %c0_i32_0 = arith.constant 0 : i32
    %2 = arith.cmpi ne, %1, %c0_i32_0 : i32
    scf.if %2 {
      %cst_34 = arith.constant 0.000000e+00 : f32
      %62 = vector.broadcast %cst_34 : f32 to vector<8x128xf32>
      %c0_35 = arith.constant 0 : index
      %c0_36 = arith.constant 0 : index
      %63 = vector.load %arg7[%c0_35, %c0_36] : memref<8x128xf32, #tpu.memory_space<vmem>>, vector<8x128xf32>
      tpu.vector_store %arg7[%c0_35, %c0_36], %62 {strides = array<i32>} : memref<8x128xf32, #tpu.memory_space<vmem>>, vector<8x128xf32>,
      %cst_37 = arith.constant 0.000000e+00 : f32
      %64 = vector.broadcast %cst_37 : f32 to vector<8x128xf32>
      %c0_38 = arith.constant 0 : index
      %c0_39 = arith.constant 0 : index
      %65 = vector.load %arg8[%c0_38, %c0_39] : memref<8x128xf32, #tpu.memory_space<vmem>>, vector<8x128xf32>
      tpu.vector_store %arg8[%c0_38, %c0_39], %64 {strides = array<i32>} : memref<8x128xf32, #tpu.memory_space<vmem>>, vector<8x128xf32>,
    } else {
    }
    %c0 = arith.constant 0 : index
    %c0_1 = arith.constant 0 : index
    %3 = vector.load %arg7[%c0, %c0_1] : memref<8x128xf32, #tpu.memory_space<vmem>>, vector<8x128xf32>
    %c0_2 = arith.constant 0 : index
    %c0_3 = arith.constant 0 : index
    %4 = vector.load %arg8[%c0_2, %c0_3] : memref<8x128xf32, #tpu.memory_space<vmem>>, vector<8x128xf32>
    %c0_i32_4 = arith.constant 0 : i32
    %5 = arith.index_cast %c0_i32_4 : i32 to index
    %c0_5 = arith.constant 0 : index
    %c0_6 = arith.constant 0 : index
    %6 = vector.load %arg4[%5, %c0_5, %c0_6] : memref<4x8x128xf32, #tpu.memory_space<vmem>>, vector<1x8x128xf32>
    %7 = vector.shape_cast %6 : vector<1x8x128xf32> to vector<8x128xf32>
    %8 = arith.index_cast %c0_i32_4 : i32 to index
    %c0_7 = arith.constant 0 : index
    %c0_8 = arith.constant 0 : index
    %9 = vector.load %arg5[%8, %c0_7, %c0_8] : memref<4x8x8xf32, #tpu.memory_space<vmem>>, vector<1x8x8xf32>
    %10 = vector.shape_cast %9 : vector<1x8x8xf32> to vector<8x8xf32>
    %cst = arith.constant dense<0.000000e+00> : vector<8x128xf32>
    %11 = tpu.matmul %10, %7, %cst {dimension_numbers = #tpu.dot_dimension_numbers<[1], [0], [0], [1], [0, 0, 1, 1], [], []>} : vector<8x8xf32>, vector<8x128xf32>, vector<8x128xf32> -> vector<8x128xf32>
    %12 = math.log %7 : vector<8x128xf32>
    %13 = arith.addf %3, %12 : vector<8x128xf32>
    %cst_9 = arith.constant 1.000000e-10 : f32
    %14 = vector.broadcast %cst_9 : f32 to vector<8x128xf32>
    %15 = arith.addf %11, %14 : vector<8x128xf32>
    %16 = math.log %15 : vector<8x128xf32>
    %17 = arith.addf %4, %16 : vector<8x128xf32>
    %c1_i32 = arith.constant 1 : i32
    %18 = arith.index_cast %c1_i32 : i32 to index
    %c0_10 = arith.constant 0 : index
    %c0_11 = arith.constant 0 : index
    %19 = vector.load %arg4[%18, %c0_10, %c0_11] : memref<4x8x128xf32, #tpu.memory_space<vmem>>, vector<1x8x128xf32>
    %20 = vector.shape_cast %19 : vector<1x8x128xf32> to vector<8x128xf32>
    %21 = arith.index_cast %c1_i32 : i32 to index
    %c0_12 = arith.constant 0 : index
    %c0_13 = arith.constant 0 : index
    %22 = vector.load %arg5[%21, %c0_12, %c0_13] : memref<4x8x8xf32, #tpu.memory_space<vmem>>, vector<1x8x8xf32>
    %23 = vector.shape_cast %22 : vector<1x8x8xf32> to vector<8x8xf32>
    %cst_14 = arith.constant dense<0.000000e+00> : vector<8x128xf32>
    %24 = tpu.matmul %23, %20, %cst_14 {dimension_numbers = #tpu.dot_dimension_numbers<[1], [0], [0], [1], [0, 0, 1, 1], [], []>} : vector<8x8xf32>, vector<8x128xf32>, vector<8x128xf32> -> vector<8x128xf32>
    %25 = math.log %20 : vector<8x128xf32>
    %26 = arith.addf %13, %25 : vector<8x128xf32>
    %cst_15 = arith.constant 1.000000e-10 : f32
    %27 = vector.broadcast %cst_15 : f32 to vector<8x128xf32>
    %28 = arith.addf %24, %27 : vector<8x128xf32>
    %29 = math.log %28 : vector<8x128xf32>
    %30 = arith.addf %17, %29 : vector<8x128xf32>
    %c2_i32 = arith.constant 2 : i32
    %31 = arith.index_cast %c2_i32 : i32 to index
    %c0_16 = arith.constant 0 : index
    %c0_17 = arith.constant 0 : index
    %32 = vector.load %arg4[%31, %c0_16, %c0_17] : memref<4x8x128xf32, #tpu.memory_space<vmem>>, vector<1x8x128xf32>
    %33 = vector.shape_cast %32 : vector<1x8x128xf32> to vector<8x128xf32>
    %34 = arith.index_cast %c2_i32 : i32 to index
    %c0_18 = arith.constant 0 : index
    %c0_19 = arith.constant 0 : index
    %35 = vector.load %arg5[%34, %c0_18, %c0_19] : memref<4x8x8xf32, #tpu.memory_space<vmem>>, vector<1x8x8xf32>
    %36 = vector.shape_cast %35 : vector<1x8x8xf32> to vector<8x8xf32>
    %cst_20 = arith.constant dense<0.000000e+00> : vector<8x128xf32>
    %37 = tpu.matmul %36, %33, %cst_20 {dimension_numbers = #tpu.dot_dimension_numbers<[1], [0], [0], [1], [0, 0, 1, 1], [], []>} : vector<8x8xf32>, vector<8x128xf32>, vector<8x128xf32> -> vector<8x128xf32>
    %38 = math.log %33 : vector<8x128xf32>
    %39 = arith.addf %26, %38 : vector<8x128xf32>
    %cst_21 = arith.constant 1.000000e-10 : f32
    %40 = vector.broadcast %cst_21 : f32 to vector<8x128xf32>
    %41 = arith.addf %37, %40 : vector<8x128xf32>
    %42 = math.log %41 : vector<8x128xf32>
    %43 = arith.addf %30, %42 : vector<8x128xf32>
    %c3_i32 = arith.constant 3 : i32
    %44 = arith.index_cast %c3_i32 : i32 to index
    %c0_22 = arith.constant 0 : index
    %c0_23 = arith.constant 0 : index
    %45 = vector.load %arg4[%44, %c0_22, %c0_23] : memref<4x8x128xf32, #tpu.memory_space<vmem>>, vector<1x8x128xf32>
    %46 = vector.shape_cast %45 : vector<1x8x128xf32> to vector<8x128xf32>
    %47 = arith.index_cast %c3_i32 : i32 to index
    %c0_24 = arith.constant 0 : index
    %c0_25 = arith.constant 0 : index
    %48 = vector.load %arg5[%47, %c0_24, %c0_25] : memref<4x8x8xf32, #tpu.memory_space<vmem>>, vector<1x8x8xf32>
    %49 = vector.shape_cast %48 : vector<1x8x8xf32> to vector<8x8xf32>
    %cst_26 = arith.constant dense<0.000000e+00> : vector<8x128xf32>
    %50 = tpu.matmul %49, %46, %cst_26 {dimension_numbers = #tpu.dot_dimension_numbers<[1], [0], [0], [1], [0, 0, 1, 1], [], []>} : vector<8x8xf32>, vector<8x128xf32>, vector<8x128xf32> -> vector<8x128xf32>
    %51 = math.log %46 : vector<8x128xf32>
    %52 = arith.addf %39, %51 : vector<8x128xf32>
    %cst_27 = arith.constant 1.000000e-10 : f32
    %53 = vector.broadcast %cst_27 : f32 to vector<8x128xf32>
    %54 = arith.addf %50, %53 : vector<8x128xf32>
    %55 = math.log %54 : vector<8x128xf32>
    %56 = arith.addf %43, %55 : vector<8x128xf32>
    %c4_i32 = arith.constant 4 : i32
    %c0_28 = arith.constant 0 : index
    %c0_29 = arith.constant 0 : index
    %57 = vector.load %arg7[%c0_28, %c0_29] : memref<8x128xf32, #tpu.memory_space<vmem>>, vector<8x128xf32>
    tpu.vector_store %arg7[%c0_28, %c0_29], %52 {strides = array<i32>} : memref<8x128xf32, #tpu.memory_space<vmem>>, vector<8x128xf32>,
    %c0_30 = arith.constant 0 : index
    %c0_31 = arith.constant 0 : index
    %58 = vector.load %arg8[%c0_30, %c0_31] : memref<8x128xf32, #tpu.memory_space<vmem>>, vector<8x128xf32>
    tpu.vector_store %arg8[%c0_30, %c0_31], %56 {strides = array<i32>} : memref<8x128xf32, #tpu.memory_space<vmem>>, vector<8x128xf32>,
    %c0_i32_32 = arith.constant 0 : i32
    %59 = arith.cmpi eq, %arg1, %c0_i32_32 : i32
    %60 = arith.extui %59 : i1 to i32
    %c0_i32_33 = arith.constant 0 : i32
    %61 = arith.cmpi ne, %60, %c0_i32_33 : i32
    scf.if %61 {
      %c0_34 = arith.constant 0 : index
      %c0_35 = arith.constant 0 : index
      %62 = vector.load %arg3[%c0_34, %c0_35] : memref<8x128xf32, #tpu.memory_space<vmem>>, vector<8x128xf32>
      %c0_36 = arith.constant 0 : index
      %c0_37 = arith.constant 0 : index
      %63 = vector.load %arg7[%c0_36, %c0_37] : memref<8x128xf32, #tpu.memory_space<vmem>>, vector<8x128xf32>
      %64 = arith.mulf %62, %63 : vector<8x128xf32>
      %65 = vector.shape_cast %64 : vector<8x128xf32> to vector<1x8x128xf32>
      %cst_38 = arith.constant dense<0.000000e+00> : vector<1xf32>
      %66 = vector.multi_reduction <add>, %65, %cst_38 [1, 2] : vector<1x8x128xf32> to vector<1xf32>
      %67 = vector.shape_cast %66 : vector<1xf32> to vector<1x1x1xf32>
      %68 = vector.extract %67[0, 0, 0] : f32 from vector<1x1x1xf32>
      %c0_39 = arith.constant 0 : index
      %c0_40 = arith.constant 0 : index
      %69 = vector.load %arg2[%c0_39, %c0_40] : memref<8x128xf32, #tpu.memory_space<vmem>>, vector<8x128xf32>
      %c0_41 = arith.constant 0 : index
      %c0_42 = arith.constant 0 : index
      %70 = vector.load %arg8[%c0_41, %c0_42] : memref<8x128xf32, #tpu.memory_space<vmem>>, vector<8x128xf32>
      %71 = arith.mulf %69, %70 : vector<8x128xf32>
      %72 = vector.shape_cast %71 : vector<8x128xf32> to vector<1x8x128xf32>
      %cst_43 = arith.constant dense<0.000000e+00> : vector<1xf32>
      %73 = vector.multi_reduction <add>, %72, %cst_43 [1, 2] : vector<1x8x128xf32> to vector<1xf32>
      %74 = vector.shape_cast %73 : vector<1xf32> to vector<1x1x1xf32>
      %75 = vector.extract %74[0, 0, 0] : f32 from vector<1x1x1xf32>
      %76 = arith.addf %68, %75 : f32
      %77 = vector.broadcast %76 : f32 to vector<8x128xf32>
      %c0_44 = arith.constant 0 : index
      %c0_45 = arith.constant 0 : index
      %78 = vector.load %arg6[%c0_44, %c0_45] : memref<8x128xf32, #tpu.memory_space<vmem>>, vector<8x128xf32>
      tpu.vector_store %arg6[%c0_44, %c0_45], %77 {strides = array<i32>} : memref<8x128xf32, #tpu.memory_space<vmem>>, vector<8x128xf32>,
    } else {
    }
    return
  }
  func.func @transform_0(%arg0: i32, %arg1: i32) -> (i32, i32) {
    %c0_i32 = arith.constant 0 : i32
    %c0_i32_0 = arith.constant 0 : i32
    return %c0_i32, %arg0 : i32, i32
  }
  func.func @transform_1(%arg0: i32, %arg1: i32) -> (i32, i32) {
    %c0_i32 = arith.constant 0 : i32
    %c0_i32_0 = arith.constant 0 : i32
    return %c0_i32, %arg0 : i32, i32
  }
  func.func @transform_2(%arg0: i32, %arg1: i32) -> (i32, i32, i32) {
    %c0_i32 = arith.constant 0 : i32
    %c0_i32_0 = arith.constant 0 : i32
    return %arg1, %c0_i32, %arg0 : i32, i32, i32
  }
  func.func @transform_3(%arg0: i32, %arg1: i32) -> (i32, i32, i32) {
    %c0_i32 = arith.constant 0 : i32
    %c0_i32_0 = arith.constant 0 : i32
    %c0_i32_1 = arith.constant 0 : i32
    return %arg1, %c0_i32, %c0_i32_0 : i32, i32, i32
  }
  func.func @transform_4(%arg0: i32, %arg1: i32) -> (i32, i32) {
    %c0_i32 = arith.constant 0 : i32
    %c0_i32_0 = arith.constant 0 : i32
    return %arg0, %c0_i32 : i32, i32
  }
}

</mosaic_0001>

<llo_original>
// kernel: tpu_custom_call.1
$region0: #{tpu_custom_call.1}
  #allocation0 [shape = 'u32[]', space=smem, size = 0x4, offset = 0x4, fixed_abs, tag = 'smem constant byte address 0x4 - core index']
  #allocation1 [shape = 'u32[144,128]{1,0:T(1,128)}', space=vmem, size = 0x12000, scoped, tag = 'internal scratch']
  #allocation2 [shape = 'f32[8,128]{1,0:T(8,128)}', space=vmem, size = 0x1000, scoped, tag = 'scratch operand']
  #allocation3 [shape = 'f32[8,128]{1,0:T(8,128)}', space=vmem, size = 0x1000, scoped, tag = 'scratch operand']
  %s0 = inlined_call_operand.hbm [shape: f32[8,128], index: 0, kind: input, shape index: {}]
  %s1 = inlined_call_operand.hbm [shape: f32[8,128], index: 1, kind: input, shape index: {}]
  %s2 = inlined_call_operand.hbm [shape: f32[4,8,128], index: 2, kind: input, shape index: {}]
  %s3 = inlined_call_operand.hbm [shape: f32[4,8,8], index: 3, kind: input, shape index: {}]
  %s4 = inlined_call_operand.hbm [shape: f32[8,128], index: 4, kind: output, shape index: {}]
  %s5 = sld [smem:[#allocation0]]
  $region50: #{tpu_custom_call.1} parent=0
    _
  %s7 = ssub.s32 1, %s5
  %s8 = scalar_select 0, %s7, %s5
  $region1: #{tpu_custom_call.1} parent=0
    #allocation4 [shape = 'u8[4096]{0}', space=vmem, size = 0x1000, scoped, tag = 'input window, operand 0, single buffered']
    #allocation5 [shape = 's32[1]{0}', space=sflag, size = 0x4, scoped, tag = 'scoped memory for tpu_custom_call.1']
    #allocation6 [shape = 's32[1]{0}', space=sflag, size = 0x4, scoped, tag = 'scoped memory for tpu_custom_call.1']
    #allocation7 [shape = 'u8[4096]{0}', space=vmem, size = 0x1000, scoped, tag = 'input window, operand 1, single buffered']
    #allocation8 [shape = 's32[1]{0}', space=sflag, size = 0x4, scoped, tag = 'scoped memory for tpu_custom_call.1']
    #allocation9 [shape = 'u8[16384]{0}', space=vmem, size = 0x4000, scoped, tag = 'input window, operand 2, single buffered']
    #allocation10 [shape = 'u8[16384]{0}', space=vmem, size = 0x4000, scoped, tag = 'input window, operand 3, single buffered']
    #allocation11 [shape = 's32[1]{0}', space=sflag, size = 0x4, scoped, tag = 'scoped memory for tpu_custom_call.1']
    #allocation12 [shape = 'u8[4096]{0}', space=vmem, size = 0x1000, scoped, tag = 'output window, operand 0, single buffered']
    %9 = vsyncpa [#allocation5], 0
    %10 = vsyncpa [#allocation8], 0
    %11 = vsyncpa [#allocation11], 0
    %12 = vsyncpa [#allocation6], 0
    // Predicated region
    $region2: #{tpu_custom_call.1} parent=1 // pred_check
      _
    $region3: #{tpu_custom_call.1} parent=1 // pred_check_branch
      %14 = sbr.rel (0) target = $region5
    $region4: #{tpu_custom_call.1} parent=1 // pred_region
      %s16 = ssub.s32 128, 128
      %17 = vsyncadd [#allocation5], %s16
      %s19 = sshll.u32 [#allocation4], 4
      %s20 = int_to_ptr.vmem [resolvable:$true] %s19
      %22 = dma.hbm_to_vmem [thread:$0]  %s0, 128, %s20, [#allocation5]
    $region5: #{tpu_custom_call.1} parent=1 // pred_fallthru
      _
    // Predicated region
    $region6: #{tpu_custom_call.1} parent=1 // pred_check
      _
    $region7: #{tpu_custom_call.1} parent=1 // pred_check_branch
      %24 = sbr.rel (0) target = $region9
    $region8: #{tpu_custom_call.1} parent=1 // pred_region
      %s26 = ssub.s32 128, 128
      %27 = vsyncadd [#allocation8], %s26
      %s29 = sshll.u32 [#allocation7], 4
      %s30 = int_to_ptr.vmem [resolvable:$true] %s29
      %32 = dma.hbm_to_vmem [thread:$0]  %s1, 128, %s30, [#allocation8]
    $region9: #{tpu_custom_call.1} parent=1 // pred_fallthru
      _
    // Predicated region
    $region10: #{tpu_custom_call.1} parent=1 // pred_check
      _
    $region11: #{tpu_custom_call.1} parent=1 // pred_check_branch
      %34 = sbr.rel (0) target = $region13
    $region12: #{tpu_custom_call.1} parent=1 // pred_region
      %s36 = ssub.s32 512, 512
      %37 = vsyncadd [#allocation8], %s36
      %s38 = sshll.u32 [#allocation9], 4
      %s39 = int_to_ptr.vmem [resolvable:$true] %s38
      %44 = dma.hbm_to_vmem [thread:$0]  %s2, 512, %s39, [#allocation8], 128, 128, 8
    $region13: #{tpu_custom_call.1} parent=1 // pred_fallthru
      _
    // Predicated region
    $region14: #{tpu_custom_call.1} parent=1 // pred_check
      _
    $region15: #{tpu_custom_call.1} parent=1 // pred_check_branch
      %46 = sbr.rel (0) target = $region17
    $region16: #{tpu_custom_call.1} parent=1 // pred_region
      %s48 = ssub.s32 512, 512
      %49 = vsyncadd [#allocation11], %s48
      %s50 = sshll.u32 [#allocation10], 4
      %s51 = int_to_ptr.vmem [resolvable:$true] %s50
      %56 = dma.hbm_to_vmem [thread:$0]  %s3, 512, %s51, [#allocation11], 128, 128, 8
    $region17: #{tpu_custom_call.1} parent=1 // pred_fallthru
      _
    // Predicated region
    $region18: #{tpu_custom_call.1} parent=1 // pred_check
      _
    $region19: #{tpu_custom_call.1} parent=1 // pred_check_branch
      %58 = sbr.rel (0) target = $region21
    $region20: #{tpu_custom_call.1} parent=1 // pred_region
      %59 = dma.done [#allocation5], 128
    $region21: #{tpu_custom_call.1} parent=1 // pred_fallthru
      _
    // Predicated region
    $region22: #{tpu_custom_call.1} parent=1 // pred_check
      _
    $region23: #{tpu_custom_call.1} parent=1 // pred_check_branch
      %61 = sbr.rel (0) target = $region25
    $region24: #{tpu_custom_call.1} parent=1 // pred_region
      %62 = dma.done [#allocation8], 128
    $region25: #{tpu_custom_call.1} parent=1 // pred_fallthru
      _
    // Predicated region
    $region26: #{tpu_custom_call.1} parent=1 // pred_check
      _
    $region27: #{tpu_custom_call.1} parent=1 // pred_check_branch
      %64 = sbr.rel (0) target = $region29
    $region28: #{tpu_custom_call.1} parent=1 // pred_region
      %65 = dma.done [#allocation8], 512
    $region29: #{tpu_custom_call.1} parent=1 // pred_fallthru
      _
    // Predicated region
    $region30: #{tpu_custom_call.1} parent=1 // pred_check
      _
    $region31: #{tpu_custom_call.1} parent=1 // pred_check_branch
      %67 = sbr.rel (0) target = $region33
    $region32: #{tpu_custom_call.1} parent=1 // pred_region
      %68 = dma.done [#allocation11], 512
    $region33: #{tpu_custom_call.1} parent=1 // pred_fallthru
      _
    %p69 = scmp.eq.s32.totalorder 0, 0
    // Predicated region
    $region34: #{tpu_custom_call.1} parent=1 // pred_check
      %p70 = pneg %p69
    $region35: #{tpu_custom_call.1} parent=1 // pred_check_branch
      %72 = sbr.rel (%p70) target = $region37
    $region36: #{tpu_custom_call.1} parent=1 // pred_region
      %73 = vst [vmem:[#allocation2] sm:$0xff] 0.0
      %74 = vst [vmem:[#allocation3] sm:$0xff] 0.0
    $region37: #{tpu_custom_call.1} parent=1 // pred_fallthru
      _
    %v75 = vld [vmem:[#allocation2] sm:$0xff]
    %v76 = vld [vmem:[#allocation3] sm:$0xff]
    %v77 = vld [vmem:[#allocation9] sm:$0xff]
    %v78 = vld [vmem:[#allocation10] sm:$0xff]
    %v79 = vlog2.pop %v77
    %v80 = vmul.f32 %v79, 0.6931472
    %v81 = vadd.f32 %v75, %v80
    %vm82 = vcmask 64512
    %v84 = vsel %vm82, %v78, 0
    %86 = vmatprep.subr.mxu0 0.0
    %87 = vmatpush1.msra.mxu0 %v77
    %88 = vmatprep.subr.mxu0 0.0
    %89 = vmatpush1.msra.mxu0 0.0
    %90 = vmatprep.subr.mxu0 0.0
    %91 = vmatpush1.msra.mxu0 0.0
    %92 = vmatprep.subr.mxu0 0.0
    %93 = vmatpush1.msra.mxu0 0.0
    %94 = vmatprep.subr.mxu0 0.0
    %95 = vmatpush1.msra.mxu0 0.0
    %96 = vmatprep.subr.mxu0 0.0
    %97 = vmatpush1.msra.mxu0 0.0
    %98 = vmatprep.subr.mxu0 0.0
    %99 = vmatpush1.msra.mxu0 0.0
    %100 = vmatprep.subr.mxu0 0.0
    %101 = vmatpush1.msra.mxu0 0.0
    %102 = vmatprep.subr.mxu0 0.0
    %103 = vmatpush1.msra.mxu0 0.0
    %104 = vmatprep.subr.mxu0 0.0
    %105 = vmatpush1.msra.mxu0 0.0
    %106 = vmatprep.subr.mxu0 0.0
    %107 = vmatpush1.msra.mxu0 0.0
    %108 = vmatprep.subr.mxu0 0.0
    %109 = vmatpush1.msra.mxu0 0.0
    %110 = vmatprep.subr.mxu0 0.0
    %111 = vmatpush1.msra.mxu0 0.0
    %112 = vmatprep.subr.mxu0 0.0
    %113 = vmatpush1.msra.mxu0 0.0
    %114 = vmatprep.subr.mxu0 0.0
    %115 = vmatpush1.msra.mxu0 0.0
    %116 = vmatprep.subr.mxu0 0.0
    %117 = vmatpush1.msra.mxu0 0.0
    %118 = vmatprep.subr.mxu0 0.0
    %119 = vmatpush1.msra.mxu0 0.0
    %120 = vmatprep.subr.mxu0 0.0
    %121 = vmatpush1.msra.mxu0 0.0
    %122 = vmatprep.subr.mxu0 0.0
    %123 = vmatpush1.msra.mxu0 0.0
    %124 = vmatprep.subr.mxu0 0.0
    %125 = vmatpush1.msra.mxu0 0.0
    %126 = vmatprep.subr.mxu0 0.0
    %127 = vmatpush1.msra.mxu0 0.0
    %128 = vmatprep.subr.mxu0 0.0
    %129 = vmatpush1.msra.mxu0 0.0
    %130 = vmatprep.subr.mxu0 0.0
    %131 = vmatpush1.msra.mxu0 0.0
    %132 = vmatprep.subr.mxu0 0.0
    %133 = vmatpush1.msra.mxu0 0.0
    %134 = vmatprep.subr.mxu0 0.0
    %135 = vmatpush1.msra.mxu0 0.0
    %136 = vmatprep.subr.mxu0 0.0
    %137 = vmatpush1.msra.mxu0 0.0
    %138 = vmatprep.subr.mxu0 0.0
    %139 = vmatpush1.msra.mxu0 0.0
    %140 = vmatprep.subr.mxu0 0.0
    %141 = vmatpush1.msra.mxu0 0.0
    %142 = vmatprep.subr.mxu0 0.0
    %143 = vmatpush1.msra.mxu0 0.0
    %144 = vmatprep.subr.mxu0 0.0
    %145 = vmatpush1.msra.mxu0 0.0
    %146 = vmatprep.subr.mxu0 0.0
    %147 = vmatpush1.msra.mxu0 0.0
    %148 = vmatprep.subr.mxu0 0.0
    %149 = vmatpush1.msra.mxu0 0.0
    %150 = vmatprep.mubr.f32.mxu0 0.0
    %151 = vmatmul.mubr.f32.gmra.mrb[0].mxu0 %v84
    %v152 = vpop.f32.mrb[0].mxu0
    %v153 = vadd.f32 1e-10, %v152
    %v154 = vpop.f32.mrb[0].mxu0
    %155 = vdwg.mxu0
    %v156 = vlog2.pop %v153
    %v157 = vmul.f32 %v156, 0.6931472
    %v158 = vadd.f32 %v76, %v157
    %s159 = scalar_lea.vmem [#allocation9], 8
    %v160 = vld [vmem:[%s159] sm:$0xff]
    %s161 = scalar_lea.vmem [#allocation10], 8
    %v162 = vld [vmem:[%s161] sm:$0xff]
    %v163 = vlog2.pop %v160
    %v164 = vmul.f32 %v163, 0.6931472
    %v165 = vadd.f32 %v81, %v164
    %v167 = vsel %vm82, %v162, 0
    %169 = vmatprep.subr.mxu0 0.0
    %170 = vmatpush1.msra.mxu0 %v160
    %171 = vmatprep.subr.mxu0 0.0
    %172 = vmatpush1.msra.mxu0 0.0
    %173 = vmatprep.subr.mxu0 0.0
    %174 = vmatpush1.msra.mxu0 0.0
    %175 = vmatprep.subr.mxu0 0.0
    %176 = vmatpush1.msra.mxu0 0.0
    %177 = vmatprep.subr.mxu0 0.0
    %178 = vmatpush1.msra.mxu0 0.0
    %179 = vmatprep.subr.mxu0 0.0
    %180 = vmatpush1.msra.mxu0 0.0
    %181 = vmatprep.subr.mxu0 0.0
    %182 = vmatpush1.msra.mxu0 0.0
    %183 = vmatprep.subr.mxu0 0.0
    %184 = vmatpush1.msra.mxu0 0.0
    %185 = vmatprep.subr.mxu0 0.0
    %186 = vmatpush1.msra.mxu0 0.0
    %187 = vmatprep.subr.mxu0 0.0
    %188 = vmatpush1.msra.mxu0 0.0
    %189 = vmatprep.subr.mxu0 0.0
    %190 = vmatpush1.msra.mxu0 0.0
    %191 = vmatprep.subr.mxu0 0.0
    %192 = vmatpush1.msra.mxu0 0.0
    %193 = vmatprep.subr.mxu0 0.0
    %194 = vmatpush1.msra.mxu0 0.0
    %195 = vmatprep.subr.mxu0 0.0
    %196 = vmatpush1.msra.mxu0 0.0
    %197 = vmatprep.subr.mxu0 0.0
    %198 = vmatpush1.msra.mxu0 0.0
    %199 = vmatprep.subr.mxu0 0.0
    %200 = vmatpush1.msra.mxu0 0.0
    %201 = vmatprep.subr.mxu0 0.0
    %202 = vmatpush1.msra.mxu0 0.0
    %203 = vmatprep.subr.mxu0 0.0
    %204 = vmatpush1.msra.mxu0 0.0
    %205 = vmatprep.subr.mxu0 0.0
    %206 = vmatpush1.msra.mxu0 0.0
    %207 = vmatprep.subr.mxu0 0.0
    %208 = vmatpush1.msra.mxu0 0.0
    %209 = vmatprep.subr.mxu0 0.0
    %210 = vmatpush1.msra.mxu0 0.0
    %211 = vmatprep.subr.mxu0 0.0
    %212 = vmatpush1.msra.mxu0 0.0
    %213 = vmatprep.subr.mxu0 0.0
    %214 = vmatpush1.msra.mxu0 0.0
    %215 = vmatprep.subr.mxu0 0.0
    %216 = vmatpush1.msra.mxu0 0.0
    %217 = vmatprep.subr.mxu0 0.0
    %218 = vmatpush1.msra.mxu0 0.0
    %219 = vmatprep.subr.mxu0 0.0
    %220 = vmatpush1.msra.mxu0 0.0
    %221 = vmatprep.subr.mxu0 0.0
    %222 = vmatpush1.msra.mxu0 0.0
    %223 = vmatprep.subr.mxu0 0.0
    %224 = vmatpush1.msra.mxu0 0.0
    %225 = vmatprep.subr.mxu0 0.0
    %226 = vmatpush1.msra.mxu0 0.0
    %227 = vmatprep.subr.mxu0 0.0
    %228 = vmatpush1.msra.mxu0 0.0
    %229 = vmatprep.subr.mxu0 0.0
    %230 = vmatpush1.msra.mxu0 0.0
    %231 = vmatprep.subr.mxu0 0.0
    %232 = vmatpush1.msra.mxu0 0.0
    %233 = vmatprep.mubr.f32.mxu0 0.0
    %234 = vmatmul.mubr.f32.gmra.mrb[0].mxu0 %v167
    %v235 = vpop.f32.mrb[0].mxu0
    %v236 = vadd.f32 1e-10, %v235
    %v237 = vpop.f32.mrb[0].mxu0
    %238 = vdwg.mxu0
    %v239 = vlog2.pop %v236
    %v240 = vmul.f32 %v239, 0.6931472
    %v241 = vadd.f32 %v158, %v240
    %s242 = scalar_lea.vmem [#allocation9], 16
    %v243 = vld [vmem:[%s242] sm:$0xff]
    %s244 = scalar_lea.vmem [#allocation10], 16
    %v245 = vld [vmem:[%s244] sm:$0xff]
    %v246 = vlog2.pop %v243
    %v247 = vmul.f32 %v246, 0.6931472
    %v248 = vadd.f32 %v165, %v247
    %v250 = vsel %vm82, %v245, 0
    %252 = vmatprep.subr.mxu0 0.0
    %253 = vmatpush1.msra.mxu0 %v243
    %254 = vmatprep.subr.mxu0 0.0
    %255 = vmatpush1.msra.mxu0 0.0
    %256 = vmatprep.subr.mxu0 0.0
    %257 = vmatpush1.msra.mxu0 0.0
    %258 = vmatprep.subr.mxu0 0.0
    %259 = vmatpush1.msra.mxu0 0.0
    %260 = vmatprep.subr.mxu0 0.0
    %261 = vmatpush1.msra.mxu0 0.0
    %262 = vmatprep.subr.mxu0 0.0
    %263 = vmatpush1.msra.mxu0 0.0
    %264 = vmatprep.subr.mxu0 0.0
    %265 = vmatpush1.msra.mxu0 0.0
    %266 = vmatprep.subr.mxu0 0.0
    %267 = vmatpush1.msra.mxu0 0.0
    %268 = vmatprep.subr.mxu0 0.0
    %269 = vmatpush1.msra.mxu0 0.0
    %270 = vmatprep.subr.mxu0 0.0
    %271 = vmatpush1.msra.mxu0 0.0
    %272 = vmatprep.subr.mxu0 0.0
    %273 = vmatpush1.msra.mxu0 0.0
    %274 = vmatprep.subr.mxu0 0.0
    %275 = vmatpush1.msra.mxu0 0.0
    %276 = vmatprep.subr.mxu0 0.0
    %277 = vmatpush1.msra.mxu0 0.0
    %278 = vmatprep.subr.mxu0 0.0
    %279 = vmatpush1.msra.mxu0 0.0
    %280 = vmatprep.subr.mxu0 0.0
    %281 = vmatpush1.msra.mxu0 0.0
    %282 = vmatprep.subr.mxu0 0.0
    %283 = vmatpush1.msra.mxu0 0.0
    %284 = vmatprep.subr.mxu0 0.0
    %285 = vmatpush1.msra.mxu0 0.0
    %286 = vmatprep.subr.mxu0 0.0
    %287 = vmatpush1.msra.mxu0 0.0
    %288 = vmatprep.subr.mxu0 0.0
    %289 = vmatpush1.msra.mxu0 0.0
    %290 = vmatprep.subr.mxu0 0.0
    %291 = vmatpush1.msra.mxu0 0.0
    %292 = vmatprep.subr.mxu0 0.0
    %293 = vmatpush1.msra.mxu0 0.0
    %294 = vmatprep.subr.mxu0 0.0
    %295 = vmatpush1.msra.mxu0 0.0
    %296 = vmatprep.subr.mxu0 0.0
    %297 = vmatpush1.msra.mxu0 0.0
    %298 = vmatprep.subr.mxu0 0.0
    %299 = vmatpush1.msra.mxu0 0.0
    %300 = vmatprep.subr.mxu0 0.0
    %301 = vmatpush1.msra.mxu0 0.0
    %302 = vmatprep.subr.mxu0 0.0
    %303 = vmatpush1.msra.mxu0 0.0
    %304 = vmatprep.subr.mxu0 0.0
    %305 = vmatpush1.msra.mxu0 0.0
    %306 = vmatprep.subr.mxu0 0.0
    %307 = vmatpush1.msra.mxu0 0.0
    %308 = vmatprep.subr.mxu0 0.0
    %309 = vmatpush1.msra.mxu0 0.0
    %310 = vmatprep.subr.mxu0 0.0
    %311 = vmatpush1.msra.mxu0 0.0
    %312 = vmatprep.subr.mxu0 0.0
    %313 = vmatpush1.msra.mxu0 0.0
    %314 = vmatprep.subr.mxu0 0.0
    %315 = vmatpush1.msra.mxu0 0.0
    %316 = vmatprep.mubr.f32.mxu0 0.0
    %317 = vmatmul.mubr.f32.gmra.mrb[0].mxu0 %v250
    %v318 = vpop.f32.mrb[0].mxu0
    %v319 = vadd.f32 1e-10, %v318
    %v320 = vpop.f32.mrb[0].mxu0
    %321 = vdwg.mxu0
    %v322 = vlog2.pop %v319
    %v323 = vmul.f32 %v322, 0.6931472
    %v324 = vadd.f32 %v241, %v323
    %s325 = scalar_lea.vmem [#allocation9], 24
    %v326 = vld [vmem:[%s325] sm:$0xff]
    %s327 = scalar_lea.vmem [#allocation10], 24
    %v328 = vld [vmem:[%s327] sm:$0xff]
    %v329 = vlog2.pop %v326
    %v330 = vmul.f32 %v329, 0.6931472
    %v331 = vadd.f32 %v248, %v330
    %v333 = vsel %vm82, %v328, 0
    %335 = vmatprep.subr.mxu0 0.0
    %336 = vmatpush1.msra.mxu0 %v326
    %337 = vmatprep.subr.mxu0 0.0
    %338 = vmatpush1.msra.mxu0 0.0
    %339 = vmatprep.subr.mxu0 0.0
    %340 = vmatpush1.msra.mxu0 0.0
    %341 = vmatprep.subr.mxu0 0.0
    %342 = vmatpush1.msra.mxu0 0.0
    %343 = vmatprep.subr.mxu0 0.0
    %344 = vmatpush1.msra.mxu0 0.0
    %345 = vmatprep.subr.mxu0 0.0
    %346 = vmatpush1.msra.mxu0 0.0
    %347 = vmatprep.subr.mxu0 0.0
    %348 = vmatpush1.msra.mxu0 0.0
    %349 = vmatprep.subr.mxu0 0.0
    %350 = vmatpush1.msra.mxu0 0.0
    %351 = vmatprep.subr.mxu0 0.0
    %352 = vmatpush1.msra.mxu0 0.0
    %353 = vmatprep.subr.mxu0 0.0
    %354 = vmatpush1.msra.mxu0 0.0
    %355 = vmatprep.subr.mxu0 0.0
    %356 = vmatpush1.msra.mxu0 0.0
    %357 = vmatprep.subr.mxu0 0.0
    %358 = vmatpush1.msra.mxu0 0.0
    %359 = vmatprep.subr.mxu0 0.0
    %360 = vmatpush1.msra.mxu0 0.0
    %361 = vmatprep.subr.mxu0 0.0
    %362 = vmatpush1.msra.mxu0 0.0
    %363 = vmatprep.subr.mxu0 0.0
    %364 = vmatpush1.msra.mxu0 0.0
    %365 = vmatprep.subr.mxu0 0.0
    %366 = vmatpush1.msra.mxu0 0.0
    %367 = vmatprep.subr.mxu0 0.0
    %368 = vmatpush1.msra.mxu0 0.0
    %369 = vmatprep.subr.mxu0 0.0
    %370 = vmatpush1.msra.mxu0 0.0
    %371 = vmatprep.subr.mxu0 0.0
    %372 = vmatpush1.msra.mxu0 0.0
    %373 = vmatprep.subr.mxu0 0.0
    %374 = vmatpush1.msra.mxu0 0.0
    %375 = vmatprep.subr.mxu0 0.0
    %376 = vmatpush1.msra.mxu0 0.0
    %377 = vmatprep.subr.mxu0 0.0
    %378 = vmatpush1.msra.mxu0 0.0
    %379 = vmatprep.subr.mxu0 0.0
    %380 = vmatpush1.msra.mxu0 0.0
    %381 = vmatprep.subr.mxu0 0.0
    %382 = vmatpush1.msra.mxu0 0.0
    %383 = vmatprep.subr.mxu0 0.0
    %384 = vmatpush1.msra.mxu0 0.0
    %385 = vmatprep.subr.mxu0 0.0
    %386 = vmatpush1.msra.mxu0 0.0
    %387 = vmatprep.subr.mxu0 0.0
    %388 = vmatpush1.msra.mxu0 0.0
    %389 = vmatprep.subr.mxu0 0.0
    %390 = vmatpush1.msra.mxu0 0.0
    %391 = vmatprep.subr.mxu0 0.0
    %392 = vmatpush1.msra.mxu0 0.0
    %393 = vmatprep.subr.mxu0 0.0
    %394 = vmatpush1.msra.mxu0 0.0
    %395 = vmatprep.subr.mxu0 0.0
    %396 = vmatpush1.msra.mxu0 0.0
    %397 = vmatprep.subr.mxu0 0.0
    %398 = vmatpush1.msra.mxu0 0.0
    %399 = vmatprep.mubr.f32.mxu0 0.0
    %400 = vmatmul.mubr.f32.gmra.mrb[0].mxu0 %v333
    %v401 = vpop.f32.mrb[0].mxu0
    %v402 = vadd.f32 1e-10, %v401
    %v403 = vpop.f32.mrb[0].mxu0
    %404 = vdwg.mxu0
    %v405 = vlog2.pop %v402
    %v406 = vmul.f32 %v405, 0.6931472
    %v407 = vadd.f32 %v324, %v406
    %408 = vst [vmem:[#allocation2] sm:$0xff] %v331
    %409 = vst [vmem:[#allocation3] sm:$0xff] %v407
    // Predicated region
    $region38: #{tpu_custom_call.1} parent=1 // pred_check
      %p410 = pneg %p69
    $region39: #{tpu_custom_call.1} parent=1 // pred_check_branch
      %412 = sbr.rel (%p410) target = $region41
    $region40: #{tpu_custom_call.1} parent=1 // pred_region
      %v413 = vld [vmem:[#allocation7] sm:$0xff]
      %v414 = vld [vmem:[#allocation2] sm:$0xff]
      %v415 = vmul.f32 %v413, %v414
      %416 = vadd.xlane.f32.xlu0 %v415
      %v417 = vpop.xlane.xlu0 %416
      %v418 = vrot.slane %v417, 4
      %v419 = vadd.f32 %v417, %v418
      %v420 = vrot.slane %v419, 2
      %v421 = vadd.f32 %v419, %v420
      %v422 = vrot.slane %v421, 1
      %v423 = vadd.f32 %v421, %v422
      %s424 = vtos %v423
      %v425 = vld [vmem:[#allocation4] sm:$0xff]
      %v426 = vld [vmem:[#allocation3] sm:$0xff]
      %v427 = vmul.f32 %v425, %v426
      %428 = vadd.xlane.f32.xlu0 %v427
      %v429 = vpop.xlane.xlu0 %428
      %v430 = vrot.slane %v429, 4
      %v431 = vadd.f32 %v429, %v430
      %v432 = vrot.slane %v431, 2
      %v433 = vadd.f32 %v431, %v432
      %v434 = vrot.slane %v433, 1
      %v435 = vadd.f32 %v433, %v434
      %s436 = vtos %v435
      %s437 = sadd.f32 %s424, %s436
      %v438 = vstv %s437
      %439 = vst [vmem:[#allocation12] sm:$0xff] %v438
    $region41: #{tpu_custom_call.1} parent=1 // pred_fallthru
      _
    // Predicated region
    $region42: #{tpu_custom_call.1} parent=1 // pred_check
      _
    $region43: #{tpu_custom_call.1} parent=1 // pred_check_branch
      %441 = sbr.rel (0) target = $region45
    $region44: #{tpu_custom_call.1} parent=1 // pred_region
      %s443 = ssub.s32 128, 128
      %444 = vsyncadd [#allocation6], %s443
      %s446 = sshll.u32 [#allocation12], 4
      %s447 = int_to_ptr.vmem [resolvable:$true] %s446
      %449 = dma.vmem_to_hbm [thread:$0]  %s447, 128, %s4, [#allocation6]
    $region45: #{tpu_custom_call.1} parent=1 // pred_fallthru
      _
    // Predicated region
    $region46: #{tpu_custom_call.1} parent=1 // pred_check
      _
    $region47: #{tpu_custom_call.1} parent=1 // pred_check_branch
      %451 = sbr.rel (0) target = $region49
    $region48: #{tpu_custom_call.1} parent=1 // pred_region
      %452 = dma.done [#allocation6], 128
    $region49: #{tpu_custom_call.1} parent=1 // pred_fallthru
      _
    %453 = vsyncpa [#allocation5], 1
    %454 = vsyncpa [#allocation8], 1
    %455 = vsyncpa [#allocation11], 1
    %456 = vsyncpa [#allocation6], 1

</llo_original>
